<compile_context>
chip_gen: v7x
topology: tpu7x:2x2x1
jax: 0.10.0
libtpu: 0.0.40
codegen_flags: <defaults>
</compile_context>

<pallas_src>
import functools

import jax
import jax.numpy as jnp
from jax import lax
from jax.experimental import pallas as pl
from jax.experimental.pallas import tpu as pltpu

LANES = 128
SUBLANES = 8
ACC_ROWS_MAX = 64          # wide accumulator -> independent add chains
NCORES = 2                 # megacore split; harmless (sequential) on 1-TC chips
VMEM_BUDGET = 24 << 20     # input double-buffer budget, under the 32 MiB scoped limit


def _mse_partial_kernel(rows, tile_rows, tiles_per_core, acc_rows, need_mask,
                        o_ref, t_ref, out_ref, acc_ref):
    i = pl.program_id(0)   # core-split ("parallel") axis
    j = pl.program_id(1)   # row-tile ("arbitrary") reduction axis

    @pl.when(j == 0)
    def _():
        acc_ref[...] = jnp.zeros_like(acc_ref)

    d = o_ref[...].astype(jnp.float32) - t_ref[...].astype(jnp.float32)
    d2 = d * d
    folds = tile_rows // acc_rows

    if need_mask:
        # Only edge tiles (ragged last tile / clamped overflow iterations of
        # the core split) pay for the mask; interior tiles skip it at runtime.
        g = i * tiles_per_core + j
        is_edge = (g + 1) * tile_rows > rows

        @pl.when(jnp.logical_not(is_edge))
        def _():
            acc_ref[...] += d2.reshape(folds, acc_rows, LANES).sum(axis=0)

        @pl.when(is_edge)
        def _():
            row_ids = g * tile_rows + lax.broadcasted_iota(
                jnp.int32, (tile_rows, LANES), 0)
            # Keep jnp.where (NOT mask * d2): garbage rows may be NaN/Inf.
            masked = jnp.where(row_ids < rows, d2, 0.0)
            acc_ref[...] += masked.reshape(folds, acc_rows, LANES).sum(axis=0)
    else:
        # Layout-free reshape (splits the sublane-major dim in 8-row groups);
        # the sum is plain vreg adds -- no per-step XLU cross-lane reduce.
        acc_ref[...] += d2.reshape(folds, acc_rows, LANES).sum(axis=0)

    @pl.when(j == pl.num_programs(1) - 1)
    def _():
        out_ref[...] = acc_ref[...].reshape(
            acc_rows // SUBLANES, SUBLANES, LANES).sum(axis=0)


def _mse_partial_sum_2d(o2d, t2d, rows, tile_rows_f32_equiv):
    """Sum of squared differences over a (rows, 128) slab via pallas_call."""
    itemsize = jnp.dtype(o2d.dtype).itemsize
    # Same VMEM bytes per step regardless of dtype (bf16 -> 2x rows per tile).
    max_tile = VMEM_BUDGET // (2 * 2 * LANES * itemsize)
    tile_rows = min(tile_rows_f32_equiv * max(1, 4 // itemsize), max_tile, rows)
    tile_rows -= tile_rows % SUBLANES
    if tile_rows >= ACC_ROWS_MAX:
        tile_rows -= tile_rows % ACC_ROWS_MAX
    acc_rows = ACC_ROWS_MAX if tile_rows % ACC_ROWS_MAX == 0 else SUBLANES

    num_tiles = pl.cdiv(rows, tile_rows)
    ncores = NCORES if num_tiles >= NCORES else 1   # no wasted re-DMA for 1 tile
    tiles_per_core = pl.cdiv(num_tiles, ncores)
    need_mask = (rows % tile_rows != 0) or (tiles_per_core * ncores != num_tiles)

    def in_map(i, j):
        # Clamp so overflow iterations of the core split never address an
        # out-of-range block; their contribution is zeroed by the row mask.
        return (jnp.minimum(i * tiles_per_core + j, num_tiles - 1), 0)

    kernel = functools.partial(_mse_partial_kernel, rows, tile_rows,
                               tiles_per_core, acc_rows, need_mask)

    partials = pl.pallas_call(
        kernel,
        out_shape=jax.ShapeDtypeStruct((ncores, SUBLANES, LANES), jnp.float32),
        grid_spec=pltpu.PrefetchScalarGridSpec(
            num_scalar_prefetch=0,
            grid=(ncores, tiles_per_core),
            in_specs=[
                pl.BlockSpec((tile_rows, LANES), in_map),
                pl.BlockSpec((tile_rows, LANES), in_map),
            ],
            out_specs=pl.BlockSpec((None, SUBLANES, LANES),
                                   lambda i, j: (i, 0, 0)),
            scratch_shapes=[pltpu.VMEM((acc_rows, LANES), jnp.float32)],
        ),
        compiler_params=pltpu.CompilerParams(
            dimension_semantics=("parallel", "arbitrary"),
            vmem_limit_bytes=32 << 20,
        ),
    )(o2d, t2d)

    # Single tiny cross-lane reduce on ncores x 8 x 128 partials.
    return jnp.sum(partials)


def supervised_loss(outputs, targets, *, tile_rows=8192):
    """MSE loss = mean((outputs - targets)**2), computed with a Pallas TPU kernel."""
    assert outputs.shape == targets.shape, "MSELoss requires matching shapes"
    n_elems = outputs.size
    if n_elems == 0:
        # torch.nn.MSELoss on empty tensors: mean over nothing -> NaN.
        return jnp.float32(jnp.nan)

    o_flat = outputs.reshape(-1)
    t_flat = targets.reshape(-1)

    rem = n_elems % LANES
    main_n = n_elems - rem
    rows = main_n // LANES

    tail_sq = jnp.float32(0.0)
    if rem:
        # <=127-element ragged tail handled with plain jnp -- no jnp.pad copy of
        # the full tensors.
        # TODO(synk): mask by flat element index in-kernel to also avoid the
        # prefix slice below for ragged sizes.
        o_tail = lax.slice(o_flat, (main_n,), (n_elems,)).astype(jnp.float32)
        t_tail = lax.slice(t_flat, (main_n,), (n_elems,)).astype(jnp.float32)
        tail_sq = jnp.sum((o_tail - t_tail) ** 2)

    if rows < SUBLANES:
        # Tiny tensors: a kernel launch costs more than it saves.
        if rows > 0:
            o_main = lax.slice(o_flat, (0,), (main_n,)).astype(jnp.float32)
            t_main = lax.slice(t_flat, (0,), (main_n,)).astype(jnp.float32)
            tail_sq = tail_sq + jnp.sum((o_main - t_main) ** 2)
        return tail_sq / jnp.float32(n_elems)

    if rem:
        o2d = lax.slice(o_flat, (0,), (main_n,)).reshape(rows, LANES)
        t2d = lax.slice(t_flat, (0,), (main_n,)).reshape(rows, LANES)
    else:
        o2d = o_flat.reshape(rows, LANES)   # free reshape (contiguous)
        t2d = t_flat.reshape(rows, LANES)

    main_sq = _mse_partial_sum_2d(o2d, t2d, rows, tile_rows)
    return (main_sq + tail_sq) / jnp.float32(n_elems)


if __name__ == "__main__":
    key = jax.random.PRNGKey(0)
    k1, k2 = jax.random.split(key)
    # Small NCHW-like shapes, consistent with a typical supervised regression output.
    outputs = jax.random.normal(k1, (2, 4, 16, 16), dtype=jnp.float32)
    targets = jax.random.normal(k2, (2, 4, 16, 16), dtype=jnp.float32)

    loss = supervised_loss(outputs, targets)
    jax.block_until_ready(loss)

    # Cross-check against plain-JAX reference (same semantics as nn.MSELoss()).
    ref = jnp.mean((outputs - targets) ** 2)
    assert jnp.allclose(loss, ref, rtol=1e-5, atol=1e-6), (loss, ref)

    print("KERNEL_OK")
</pallas_src>

<mosaic_0001>
module attributes {stable_mosaic.version = 11 : i64} {
  func.func @_mse_partial_kernel(%arg0: i32, %arg1: i32, %arg2: memref<16x128xf32, #tpu.memory_space<vmem>>, %arg3: memref<16x128xf32, #tpu.memory_space<vmem>>, %arg4: memref<1x8x128xf32, #tpu.memory_space<vmem>>, %arg5: memref<8x128xf32, #tpu.memory_space<vmem>>) attributes {dimension_semantics = [#tpu.dimension_semantics<parallel>, #tpu.dimension_semantics<arbitrary>], iteration_bounds = array<i64: 1, 1>, scalar_prefetch = 0 : i64, scratch_operands = 1 : i64, tpu.core_type = #tpu.core_type<tc>, window_params = [{transform_indices = @transform_0, window_bounds = array<i64: 16, 128>}, {transform_indices = @transform_1, window_bounds = array<i64: 16, 128>}, {transform_indices = @transform_2, window_bounds = array<i64: 1, 8, 128>}]} {
    %c0_i32 = arith.constant 0 : i32
    %0 = arith.cmpi eq, %arg1, %c0_i32 : i32
    %1 = arith.extui %0 : i1 to i32
    %c0_i32_0 = arith.constant 0 : i32
    %2 = arith.cmpi ne, %1, %c0_i32_0 : i32
    scf.if %2 {
      %cst_10 = arith.constant 0.000000e+00 : f32
      %15 = vector.broadcast %cst_10 : f32 to vector<8x128xf32>
      %c0_11 = arith.constant 0 : index
      %c0_12 = arith.constant 0 : index
      %16 = vector.load %arg5[%c0_11, %c0_12] : memref<8x128xf32, #tpu.memory_space<vmem>>, vector<8x128xf32>
      tpu.vector_store %arg5[%c0_11, %c0_12], %15 {strides = array<i32>} : memref<8x128xf32, #tpu.memory_space<vmem>>, vector<8x128xf32>,
    } else {
    }
    %c0 = arith.constant 0 : index
    %c0_1 = arith.constant 0 : index
    %3 = vector.load %arg2[%c0, %c0_1] : memref<16x128xf32, #tpu.memory_space<vmem>>, vector<16x128xf32>
    %c0_2 = arith.constant 0 : index
    %c0_3 = arith.constant 0 : index
    %4 = vector.load %arg3[%c0_2, %c0_3] : memref<16x128xf32, #tpu.memory_space<vmem>>, vector<16x128xf32>
    %5 = arith.subf %3, %4 : vector<16x128xf32>
    %6 = arith.mulf %5, %5 : vector<16x128xf32>
    %c0_4 = arith.constant 0 : index
    %c0_5 = arith.constant 0 : index
    %7 = vector.load %arg5[%c0_4, %c0_5] : memref<8x128xf32, #tpu.memory_space<vmem>>, vector<8x128xf32>
    %8 = vector.shape_cast %6 : vector<16x128xf32> to vector<2x8x128xf32>
    %cst = arith.constant dense<0.000000e+00> : vector<8x128xf32>
    %9 = vector.multi_reduction <add>, %8, %cst [0] : vector<2x8x128xf32> to vector<8x128xf32>
    %10 = arith.addf %7, %9 : vector<8x128xf32>
    %c0_6 = arith.constant 0 : index
    %c0_7 = arith.constant 0 : index
    %11 = vector.load %arg5[%c0_6, %c0_7] : memref<8x128xf32, #tpu.memory_space<vmem>>, vector<8x128xf32>
    tpu.vector_store %arg5[%c0_6, %c0_7], %10 {strides = array<i32>} : memref<8x128xf32, #tpu.memory_space<vmem>>, vector<8x128xf32>,
    %c0_i32_8 = arith.constant 0 : i32
    %12 = arith.cmpi eq, %arg1, %c0_i32_8 : i32
    %13 = arith.extui %12 : i1 to i32
    %c0_i32_9 = arith.constant 0 : i32
    %14 = arith.cmpi ne, %13, %c0_i32_9 : i32
    scf.if %14 {
      %c0_10 = arith.constant 0 : index
      %c0_11 = arith.constant 0 : index
      %15 = vector.load %arg5[%c0_10, %c0_11] : memref<8x128xf32, #tpu.memory_space<vmem>>, vector<8x128xf32>
      %16 = vector.shape_cast %15 : vector<8x128xf32> to vector<1x8x128xf32>
      %cst_12 = arith.constant dense<0.000000e+00> : vector<8x128xf32>
      %17 = vector.multi_reduction <add>, %16, %cst_12 [0] : vector<1x8x128xf32> to vector<8x128xf32>
      %c0_13 = arith.constant 0 : index
      %c0_14 = arith.constant 0 : index
      %c0_15 = arith.constant 0 : index
      %18 = vector.load %arg4[%c0_13, %c0_14, %c0_15] : memref<1x8x128xf32, #tpu.memory_space<vmem>>, vector<1x8x128xf32>
      %19 = vector.shape_cast %18 : vector<1x8x128xf32> to vector<8x128xf32>
      %20 = vector.shape_cast %17 : vector<8x128xf32> to vector<1x8x128xf32>
      tpu.vector_store %arg4[%c0_13, %c0_14, %c0_15], %20 {strides = array<i32>} : memref<1x8x128xf32, #tpu.memory_space<vmem>>, vector<1x8x128xf32>,
    } else {
    }
    return
  }
  func.func @transform_0(%arg0: i32, %arg1: i32) -> (i32, i32) {
    %c1_i32 = arith.constant 1 : i32
    %0 = arith.muli %arg0, %c1_i32 : i32
    %1 = arith.addi %0, %arg1 : i32
    %c0_i32 = arith.constant 0 : i32
    %2 = arith.minsi %1, %c0_i32 : i32
    %c0_i32_0 = arith.constant 0 : i32
    %c0_i32_1 = arith.constant 0 : i32
    return %2, %c0_i32_0 : i32, i32
  }
  func.func @transform_1(%arg0: i32, %arg1: i32) -> (i32, i32) {
    %c1_i32 = arith.constant 1 : i32
    %0 = arith.muli %arg0, %c1_i32 : i32
    %1 = arith.addi %0, %arg1 : i32
    %c0_i32 = arith.constant 0 : i32
    %2 = arith.minsi %1, %c0_i32 : i32
    %c0_i32_0 = arith.constant 0 : i32
    %c0_i32_1 = arith.constant 0 : i32
    return %2, %c0_i32_0 : i32, i32
  }
  func.func @transform_2(%arg0: i32, %arg1: i32) -> (i32, i32, i32) {
    %c0_i32 = arith.constant 0 : i32
    %c0_i32_0 = arith.constant 0 : i32
    %c0_i32_1 = arith.constant 0 : i32
    return %arg0, %c0_i32, %c0_i32_0 : i32, i32, i32
  }
}

</mosaic_0001>

<llo_original>
// kernel: tpu_custom_call.1
$region0: #{tpu_custom_call.1}
  #allocation0 [shape = 'u32[]', space=smem, size = 0x4, offset = 0x4, fixed_abs, tag = 'smem constant byte address 0x4 - core index']
  #allocation1 [shape = 'u32[144,128]{1,0:T(1,128)}', space=vmem, size = 0x12000, scoped, tag = 'internal scratch']
  #allocation2 [shape = 'f32[8,128]{1,0:T(8,128)}', space=vmem, size = 0x1000, scoped, tag = 'scratch operand']
  %s0 = inlined_call_operand.hbm [shape: f32[16,128], index: 0, kind: input, shape index: {}]
  %s1 = inlined_call_operand.hbm [shape: f32[16,128], index: 1, kind: input, shape index: {}]
  %s2 = inlined_call_operand.hbm [shape: f32[1,8,128], index: 2, kind: output, shape index: {}]
  %s3 = sld [smem:[#allocation0]]
  $region34: #{tpu_custom_call.1} parent=0
    _
  %s5 = ssub.s32 1, %s3
  %s6 = scalar_select 0, %s5, %s3
  $region1: #{tpu_custom_call.1} parent=0
    #allocation3 [shape = 'u8[8192]{0}', space=vmem, size = 0x2000, scoped, tag = 'input window, operand 0, single buffered']
    #allocation4 [shape = 's32[1]{0}', space=sflag, size = 0x4, scoped, tag = 'scoped memory for tpu_custom_call.1']
    #allocation5 [shape = 's32[1]{0}', space=sflag, size = 0x4, scoped, tag = 'scoped memory for tpu_custom_call.1']
    #allocation6 [shape = 'u8[8192]{0}', space=vmem, size = 0x2000, scoped, tag = 'input window, operand 1, single buffered']
    #allocation7 [shape = 's32[1]{0}', space=sflag, size = 0x4, scoped, tag = 'scoped memory for tpu_custom_call.1']
    #allocation8 [shape = 'u8[4096]{0}', space=vmem, size = 0x1000, scoped, tag = 'output window, operand 0, single buffered']
    %7 = vsyncpa [#allocation4], 0
    %8 = vsyncpa [#allocation7], 0
    %9 = vsyncpa [#allocation5], 0
    // Predicated region
    $region2: #{tpu_custom_call.1} parent=1 // pred_check
      _
    $region3: #{tpu_custom_call.1} parent=1 // pred_check_branch
      %11 = sbr.rel (0) target = $region5
    $region4: #{tpu_custom_call.1} parent=1 // pred_region
      %s12 = sadd.s32 0, 0
      %p13 = scmp.lt.s32.totalorder %s12, 0
      %s14 = scalar_select %p13, %s12, 0
      %s15 = smul.u32 2, %s14
      %s17 = ssub.s32 256, 256
      %18 = vsyncadd [#allocation4], %s17
      %s19 = smul.addr %s15, 128
      %s20 = scalar_lea.hbm %s0, %s19
      %s21 = sshll.u32 [#allocation3], 4
      %s22 = int_to_ptr.vmem [resolvable:$true] %s21
      %27 = dma.hbm_to_vmem [thread:$0]  %s20, 256, %s22, [#allocation4], 128, 128, 8
    $region5: #{tpu_custom_call.1} parent=1 // pred_fallthru
      _
    // Predicated region
    $region6: #{tpu_custom_call.1} parent=1 // pred_check
      _
    $region7: #{tpu_custom_call.1} parent=1 // pred_check_branch
      %29 = sbr.rel (0) target = $region9
    $region8: #{tpu_custom_call.1} parent=1 // pred_region
      %s30 = sadd.s32 0, 0
      %p31 = scmp.lt.s32.totalorder %s30, 0
      %s32 = scalar_select %p31, %s30, 0
      %s33 = smul.u32 2, %s32
      %s35 = ssub.s32 256, 256
      %36 = vsyncadd [#allocation7], %s35
      %s37 = smul.addr %s33, 128
      %s38 = scalar_lea.hbm %s1, %s37
      %s39 = sshll.u32 [#allocation6], 4
      %s40 = int_to_ptr.vmem [resolvable:$true] %s39
      %45 = dma.hbm_to_vmem [thread:$0]  %s38, 256, %s40, [#allocation7], 128, 128, 8
    $region9: #{tpu_custom_call.1} parent=1 // pred_fallthru
      _
    // Predicated region
    $region10: #{tpu_custom_call.1} parent=1 // pred_check
      _
    $region11: #{tpu_custom_call.1} parent=1 // pred_check_branch
      %47 = sbr.rel (0) target = $region13
    $region12: #{tpu_custom_call.1} parent=1 // pred_region
      %48 = dma.done [#allocation4], 256
    $region13: #{tpu_custom_call.1} parent=1 // pred_fallthru
      _
    // Predicated region
    $region14: #{tpu_custom_call.1} parent=1 // pred_check
      _
    $region15: #{tpu_custom_call.1} parent=1 // pred_check_branch
      %50 = sbr.rel (0) target = $region17
    $region16: #{tpu_custom_call.1} parent=1 // pred_region
      %51 = dma.done [#allocation7], 256
    $region17: #{tpu_custom_call.1} parent=1 // pred_fallthru
      _
    %s52 = sadd.s32 0, 0
    %p53 = scmp.lt.s32.totalorder %s52, 0
    %s54 = scalar_select %p53, %s52, 0
    %s55 = smul.u32 2, %s54
    %s56 = sadd.s32 0, 0
    %p57 = scmp.lt.s32.totalorder %s56, 0
    %s58 = scalar_select %p57, %s56, 0
    %s59 = smul.u32 2, %s58
    %p60 = scmp.eq.s32.totalorder 0, 0
    // Predicated region
    $region18: #{tpu_custom_call.1} parent=1 // pred_check
      %p61 = pneg %p60
    $region19: #{tpu_custom_call.1} parent=1 // pred_check_branch
      %63 = sbr.rel (%p61) target = $region21
    $region20: #{tpu_custom_call.1} parent=1 // pred_region
      %64 = vst [vmem:[#allocation2] sm:$0xff] 0.0
    $region21: #{tpu_custom_call.1} parent=1 // pred_fallthru
      _
    %v65 = vld [vmem:[#allocation3] sm:$0xff]
    %v66 = vld [vmem:[#allocation3 + $0x8] sm:$0xff]
    %v67 = vld [vmem:[#allocation6] sm:$0xff]
    %v68 = vld [vmem:[#allocation6 + $0x8] sm:$0xff]
    %v69 = vsub.f32 %v65, %v67
    %v70 = vsub.f32 %v66, %v68
    %v71 = vmul.f32 %v69, %v69
    %v72 = vmul.f32 %v70, %v70
    %v73 = vld [vmem:[#allocation2] sm:$0xff]
    %v74 = vadd.f32 %v71, %v72
    %v75 = vadd.f32 %v73, %v74
    %76 = vst [vmem:[#allocation2] sm:$0xff] %v75
    // Predicated region
    $region22: #{tpu_custom_call.1} parent=1 // pred_check
      %p77 = pneg %p60
    $region23: #{tpu_custom_call.1} parent=1 // pred_check_branch
      %79 = sbr.rel (%p77) target = $region25
    $region24: #{tpu_custom_call.1} parent=1 // pred_region
      %v80 = vld [vmem:[#allocation2] sm:$0xff]
      %v81 = vadd.f32 %v80, 0.0
      %82 = vst [vmem:[#allocation8] sm:$0xff] %v81
    $region25: #{tpu_custom_call.1} parent=1 // pred_fallthru
      _
    // Predicated region
    $region26: #{tpu_custom_call.1} parent=1 // pred_check
      _
    $region27: #{tpu_custom_call.1} parent=1 // pred_check_branch
      %84 = sbr.rel (0) target = $region29
    $region28: #{tpu_custom_call.1} parent=1 // pred_region
      %s86 = ssub.s32 128, 128
      %87 = vsyncadd [#allocation5], %s86
      %s89 = sshll.u32 [#allocation8], 4
      %s90 = int_to_ptr.vmem [resolvable:$true] %s89
      %92 = dma.vmem_to_hbm [thread:$0]  %s90, 128, %s2, [#allocation5]
    $region29: #{tpu_custom_call.1} parent=1 // pred_fallthru
      _
    // Predicated region
    $region30: #{tpu_custom_call.1} parent=1 // pred_check
      _
    $region31: #{tpu_custom_call.1} parent=1 // pred_check_branch
      %94 = sbr.rel (0) target = $region33
    $region32: #{tpu_custom_call.1} parent=1 // pred_region
      %95 = dma.done [#allocation5], 128
    $region33: #{tpu_custom_call.1} parent=1 // pred_fallthru
      _
    %96 = vsyncpa [#allocation4], 1
    %97 = vsyncpa [#allocation7], 1
    %98 = vsyncpa [#allocation5], 1

</llo_original>
